<compile_context>
chip_gen: v5e
topology: v5e:2x2
jax: 0.10.0
libtpu: 0.0.40
codegen_flags: <defaults>
</compile_context>

<pallas_src>
import functools

import jax
import jax.numpy as jnp
from jax.experimental import pallas as pl
from jax.experimental.pallas import tpu as pltpu


def _round_up(x, m):
    return (x + m - 1) // m * m


# ----------------------------------------------------------------------------
# Pallas kernels
# ----------------------------------------------------------------------------
def _conv_act_kernel(*refs, has_bias, apply_lrelu):
    """One M-tile of: out = patches @ W [+ b] [-> LeakyReLU(0.2)]. bf16 x bf16 -> f32."""
    if has_bias:
        p_ref, w_ref, b_ref, o_ref = refs
    else:
        p_ref, w_ref, o_ref = refs
        b_ref = None
    acc = jnp.dot(p_ref[...], w_ref[...], preferred_element_type=jnp.float32)
    if has_bias:
        acc = acc + b_ref[...]                    # (1, Cp) broadcast over the tile
    if apply_lrelu:
        acc = jnp.where(acc >= 0, acc, 0.2 * acc)
    o_ref[...] = acc.astype(o_ref.dtype)


def _conv_stats_kernel(p_ref, w_ref, o_ref, s_ref):
    """One M-tile of the bias-less conv GEMM, fused with per-channel BN statistics.

    s_ref is a (2, Cp) f32 block with a constant index map (resident accumulator across the
    "arbitrary" M axis): row 0 accumulates sum(x), row 1 accumulates sum(x*x).
    Zero-padded M rows / channel columns contribute exactly zero, so dividing by the real M
    outside the kernel reproduces PyTorch's batch statistics.
    """
    i = pl.program_id(0)

    @pl.when(i == 0)
    def _():
        s_ref[...] = jnp.zeros_like(s_ref)

    acc = jnp.dot(p_ref[...], w_ref[...], preferred_element_type=jnp.float32)
    o_ref[...] = acc.astype(o_ref.dtype)

    ssum = jnp.sum(acc, axis=0, keepdims=True)          # (1, Cp)
    ssq = jnp.sum(acc * acc, axis=0, keepdims=True)     # (1, Cp)
    s_ref[...] = s_ref[...] + jnp.concatenate([ssum, ssq], axis=0)


def _bn_lrelu_apply_kernel(x_ref, sc_ref, sh_ref, o_ref):
    """y = x * scale + shift; LeakyReLU(0.2). scale/shift precomputed from fused stats."""
    y = x_ref[...] * sc_ref[...] + sh_ref[...]
    o_ref[...] = jnp.where(y >= 0, y, 0.2 * y).astype(o_ref.dtype)


# ----------------------------------------------------------------------------
# pallas_call wrappers (M-tiled grids, lane-padded Cout)
# ----------------------------------------------------------------------------
def conv_gemm_act(patches, w_mat, bias, apply_lrelu, *, tile_m):
    """patches: (M_pad, K) bf16; w_mat: (K, Cp) bf16; bias: (1, Cp) f32 or None."""
    M_pad, K = patches.shape
    Cp = w_mat.shape[1]
    grid = (M_pad // tile_m,)

    in_specs = [pl.BlockSpec((tile_m, K), lambda i: (i, 0)),
                pl.BlockSpec((K, Cp), lambda i: (0, 0))]
    args = [patches, w_mat]
    if bias is not None:
        in_specs.append(pl.BlockSpec((1, Cp), lambda i: (0, 0)))
        args.append(bias)

    kernel = functools.partial(_conv_act_kernel,
                               has_bias=bias is not None, apply_lrelu=apply_lrelu)
    cost = pl.CostEstimate(
        flops=2 * M_pad * K * Cp, transcendentals=0,
        bytes_accessed=patches.size * 2 + w_mat.size * 2 + M_pad * Cp * 4)

    return pl.pallas_call(
        kernel,
        out_shape=jax.ShapeDtypeStruct((M_pad, Cp), jnp.float32),
        grid=grid,
        in_specs=in_specs,
        out_specs=pl.BlockSpec((tile_m, Cp), lambda i: (i, 0)),
        compiler_params=pltpu.CompilerParams(dimension_semantics=("parallel",)),
        cost_estimate=cost,
    )(*args)


def conv_gemm_stats(patches, w_mat, *, tile_m):
    """Bias-less conv GEMM that also returns (2, Cp) per-channel [sum, sumsq]."""
    M_pad, K = patches.shape
    Cp = w_mat.shape[1]
    grid = (M_pad // tile_m,)

    cost = pl.CostEstimate(
        flops=2 * M_pad * K * Cp, transcendentals=0,
        bytes_accessed=patches.size * 2 + w_mat.size * 2 + M_pad * Cp * 4 + 2 * Cp * 4)

    return pl.pallas_call(
        _conv_stats_kernel,
        out_shape=(jax.ShapeDtypeStruct((M_pad, Cp), jnp.float32),
                   jax.ShapeDtypeStruct((2, Cp), jnp.float32)),
        grid=grid,
        in_specs=[pl.BlockSpec((tile_m, K), lambda i: (i, 0)),
                  pl.BlockSpec((K, Cp), lambda i: (0, 0))],
        out_specs=(pl.BlockSpec((tile_m, Cp), lambda i: (i, 0)),
                   pl.BlockSpec((2, Cp), lambda i: (0, 0))),   # resident accumulator
        compiler_params=pltpu.CompilerParams(dimension_semantics=("arbitrary",)),
        cost_estimate=cost,
    )(patches, w_mat)


def bn_lrelu_apply(x, scale, shift, *, tile_m):
    """x: (M_pad, Cp) f32; scale/shift: (1, Cp) f32."""
    M_pad, Cp = x.shape
    grid = (M_pad // tile_m,)
    return pl.pallas_call(
        _bn_lrelu_apply_kernel,
        out_shape=jax.ShapeDtypeStruct((M_pad, Cp), jnp.float32),
        grid=grid,
        in_specs=[pl.BlockSpec((tile_m, Cp), lambda i: (i, 0)),
                  pl.BlockSpec((1, Cp), lambda i: (0, 0)),
                  pl.BlockSpec((1, Cp), lambda i: (0, 0))],
        out_specs=pl.BlockSpec((tile_m, Cp), lambda i: (i, 0)),
        compiler_params=pltpu.CompilerParams(dimension_semantics=("parallel",)),
    )(x, scale, shift)


# ----------------------------------------------------------------------------
# im2col glue (plain JAX, NHWC, no transposes)
# ----------------------------------------------------------------------------
def im2col_nhwc(x_nhwc, kh, kw, stride, pad):
    """x: (N, H, W, C) -> patches (N*OH*OW, C*kh*kw), feature order = Cin-major, taps minor
    (matches PyTorch weight.reshape(Cout, Cin*kh*kw))."""
    x = jnp.pad(x_nhwc, ((0, 0), (pad, pad), (pad, pad), (0, 0)))
    N, H, W, C = x.shape
    oh = (H - kh) // stride + 1
    ow = (W - kw) // stride + 1
    taps = []
    for i in range(kh):
        for j in range(kw):
            taps.append(x[:, i:i + stride * oh:stride, j:j + stride * ow:stride, :])
    p = jnp.stack(taps, axis=-1)                        # (N, OH, OW, C, kh*kw)
    p = p.reshape(N * oh * ow, C * kh * kw)
    return p, oh, ow


# ----------------------------------------------------------------------------
# Parameter construction (deterministic, synthetic)
# ----------------------------------------------------------------------------
def init_params(key, input_nc, ndf, n_layers):
    kw = 4
    layers = []   # list of dicts: {w, b or None, bn (gamma,beta) or None, stride, act}
    key, k0 = jax.random.split(key)
    layers.append(dict(
        w=0.02 * jax.random.normal(k0, (ndf, input_nc, kw, kw), jnp.float32),
        b=jnp.zeros((ndf,), jnp.float32), bn=None, stride=2, act="lrelu"))

    nf_mult = 1
    for n in range(1, n_layers):
        nf_prev, nf_mult = nf_mult, min(2 ** n, 8)
        key, kn = jax.random.split(key)
        cout, cin = ndf * nf_mult, ndf * nf_prev
        layers.append(dict(
            w=0.02 * jax.random.normal(kn, (cout, cin, kw, kw), jnp.float32),
            b=None,  # use_bias=False with BatchNorm2d
            bn=(jnp.ones((cout,), jnp.float32), jnp.zeros((cout,), jnp.float32)),
            stride=2, act="bn_lrelu"))

    nf_prev, nf_mult = nf_mult, min(2 ** n_layers, 8)
    key, kn = jax.random.split(key)
    cout, cin = ndf * nf_mult, ndf * nf_prev
    layers.append(dict(
        w=0.02 * jax.random.normal(kn, (cout, cin, kw, kw), jnp.float32),
        b=None,
        bn=(jnp.ones((cout,), jnp.float32), jnp.zeros((cout,), jnp.float32)),
        stride=1, act="bn_lrelu"))

    key, kn = jax.random.split(key)
    layers.append(dict(
        w=0.02 * jax.random.normal(kn, (1, ndf * nf_mult, kw, kw), jnp.float32),
        b=jnp.zeros((1,), jnp.float32), bn=None, stride=1, act="none"))
    return layers


# ----------------------------------------------------------------------------
# Forward pass (NHWC internally; NCHW at the boundaries to match PyTorch)
# ----------------------------------------------------------------------------
def nlayer_discriminator_forward(x_nchw, layers, *, max_tile_m=512):
    h = jnp.transpose(x_nchw, (0, 2, 3, 1))             # NCHW -> NHWC once
    N = h.shape[0]

    for lyr in layers:
        w = lyr["w"]
        Cout, Cin, kh, kw = w.shape
        K = Cin * kh * kw
        Cp = _round_up(Cout, 128)                        # lane-dense output channels

        patches, oh, ow = im2col_nhwc(h, kh, kw, lyr["stride"], 1)
        M = patches.shape[0]
        tile_m = min(max_tile_m, _round_up(M, 8))
        M_pad = _round_up(M, tile_m)

        patches = jnp.pad(patches, ((0, M_pad - M), (0, 0))).astype(jnp.bfloat16)
        w_mat = jnp.pad(w.reshape(Cout, K).T, ((0, 0), (0, Cp - Cout))).astype(jnp.bfloat16)

        if lyr["act"] == "bn_lrelu":
            out, stats = conv_gemm_stats(patches, w_mat, tile_m=tile_m)
            gamma, beta = lyr["bn"]
            gamma_p = jnp.pad(gamma, (0, Cp - Cout)).astype(jnp.float32)
            beta_p = jnp.pad(beta, (0, Cp - Cout)).astype(jnp.float32)
            mean = stats[0] / M                          # real M: padded rows contribute 0
            var = jnp.maximum(stats[1] / M - mean * mean, 0.0)   # biased variance
            scale = gamma_p * jax.lax.rsqrt(var + 1e-5)
            shift = beta_p - mean * scale
            out = bn_lrelu_apply(out, scale.reshape(1, Cp), shift.reshape(1, Cp),
                                 tile_m=tile_m)
        else:
            bias = lyr["b"]
            b2d = None
            if bias is not None:
                b2d = jnp.pad(bias, (0, Cp - Cout)).reshape(1, Cp).astype(jnp.float32)
            out = conv_gemm_act(patches, w_mat, b2d,
                                apply_lrelu=(lyr["act"] == "lrelu"), tile_m=tile_m)

        h = out[:M, :Cout].reshape(N, oh, ow, Cout)      # stay NHWC

    return jnp.transpose(h, (0, 3, 1, 2))                # NHWC -> NCHW at the boundary


# ----------------------------------------------------------------------------
# Main
# ----------------------------------------------------------------------------
if __name__ == "__main__":
    key = jax.random.PRNGKey(0)
    kx, kp = jax.random.split(key)

    # Small shapes consistent with the module: n_layers=3 needs >=32 spatial so the
    # final two 4x4 stride-1 convs have valid outputs.
    N, input_nc, H, W = 2, 4, 32, 32
    ndf, n_layers = 8, 3

    x = jax.random.normal(kx, (N, input_nc, H, W), jnp.float32)   # NCHW like PyTorch
    layers = init_params(kp, input_nc, ndf, n_layers)

    out = nlayer_discriminator_forward(x, layers)
    out = jax.block_until_ready(out)

    assert out.shape == (N, 1, 2, 2), out.shape
    assert bool(jnp.all(jnp.isfinite(out)))
    print("KERNEL_OK")
</pallas_src>

<mosaic_0001>
module attributes {stable_mosaic.version = 11 : i64} {
  func.func @_conv_act_kernel(%arg0: i32, %arg1: memref<512x64xbf16, #tpu.memory_space<vmem>>, %arg2: memref<64x128xbf16, #tpu.memory_space<vmem>>, %arg3: memref<1x128xf32, #tpu.memory_space<vmem>>, %arg4: memref<512x128xf32, #tpu.memory_space<vmem>>) attributes {dimension_semantics = [#tpu.dimension_semantics<parallel>], iteration_bounds = array<i64: 1>, scalar_prefetch = 0 : i64, scratch_operands = 0 : i64, tpu.core_type = #tpu.core_type<tc>, window_params = [{transform_indices = @transform_0, window_bounds = array<i64: 512, 64>}, {pipeline_mode = #tpu.pipeline_mode<synchronous>, transform_indices = @transform_1, window_bounds = array<i64: 64, 128>}, {pipeline_mode = #tpu.pipeline_mode<synchronous>, transform_indices = @transform_2, window_bounds = array<i64: 1, 128>}, {transform_indices = @transform_3, window_bounds = array<i64: 512, 128>}]} {
    %c0 = arith.constant 0 : index
    %c0_0 = arith.constant 0 : index
    %0 = vector.load %arg1[%c0, %c0_0] : memref<512x64xbf16, #tpu.memory_space<vmem>>, vector<512x64xbf16>
    %c0_1 = arith.constant 0 : index
    %c0_2 = arith.constant 0 : index
    %1 = vector.load %arg2[%c0_1, %c0_2] : memref<64x128xbf16, #tpu.memory_space<vmem>>, vector<64x128xbf16>
    %cst = arith.constant dense<0.000000e+00> : vector<512x128xf32>
    %2 = tpu.matmul %0, %1, %cst {dimension_numbers = #tpu.dot_dimension_numbers<[1], [0], [0], [1], [0, 0, 1, 1], [], []>} : vector<512x64xbf16>, vector<64x128xbf16>, vector<512x128xf32> -> vector<512x128xf32>
    %c0_3 = arith.constant 0 : index
    %c0_4 = arith.constant 0 : index
    %3 = vector.load %arg3[%c0_3, %c0_4] : memref<1x128xf32, #tpu.memory_space<vmem>>, vector<1x128xf32>
    %4 = vector.broadcast %3 : vector<1x128xf32> to vector<512x128xf32>
    %5 = arith.addf %2, %4 : vector<512x128xf32>
    %cst_5 = arith.constant 0.000000e+00 : f32
    %6 = vector.broadcast %cst_5 : f32 to vector<512x128xf32>
    %7 = arith.cmpf oge, %5, %6 : vector<512x128xf32>
    %cst_6 = arith.constant 2.000000e-01 : f32
    %8 = vector.broadcast %cst_6 : f32 to vector<512x128xf32>
    %9 = arith.mulf %8, %5 : vector<512x128xf32>
    %10 = arith.select %7, %5, %9 : vector<512x128xi1>, vector<512x128xf32>
    %c0_7 = arith.constant 0 : index
    %c0_8 = arith.constant 0 : index
    %11 = vector.load %arg4[%c0_7, %c0_8] : memref<512x128xf32, #tpu.memory_space<vmem>>, vector<512x128xf32>
    tpu.vector_store %arg4[%c0_7, %c0_8], %10 {strides = array<i32>} : memref<512x128xf32, #tpu.memory_space<vmem>>, vector<512x128xf32>,
    return
  }
  func.func @transform_0(%arg0: i32) -> (i32, i32) {
    %c0_i32 = arith.constant 0 : i32
    %c0_i32_0 = arith.constant 0 : i32
    return %arg0, %c0_i32 : i32, i32
  }
  func.func @transform_1(%arg0: i32) -> (i32, i32) {
    %c0_i32 = arith.constant 0 : i32
    %c0_i32_0 = arith.constant 0 : i32
    %c0_i32_1 = arith.constant 0 : i32
    return %c0_i32, %c0_i32_0 : i32, i32
  }
  func.func @transform_2(%arg0: i32) -> (i32, i32) {
    %c0_i32 = arith.constant 0 : i32
    %c0_i32_0 = arith.constant 0 : i32
    %c0_i32_1 = arith.constant 0 : i32
    return %c0_i32, %c0_i32_0 : i32, i32
  }
  func.func @transform_3(%arg0: i32) -> (i32, i32) {
    %c0_i32 = arith.constant 0 : i32
    %c0_i32_0 = arith.constant 0 : i32
    return %arg0, %c0_i32 : i32, i32
  }
}

</mosaic_0001>

<llo_original>
// kernel: tpu_custom_call.1
$region0: #{tpu_custom_call.1}
  #allocation0 [shape = 'u32[]', space=smem, size = 0x4, offset = 0x4, fixed_abs, tag = 'smem constant byte address 0x4 - core index']
  #allocation1 [shape = 'u32[72,128]{1,0:T(1,128)}', space=vmem, size = 0x9000, scoped, tag = 'internal scratch']
  %s0 = inlined_call_operand.vmem [shape: bf16[512,64], index: 0, kind: input, shape index: {}]
  %s1 = inlined_call_operand.vmem [shape: bf16[64,128], index: 1, kind: input, shape index: {}]
  %s2 = inlined_call_operand.vmem [shape: f32[1,128], index: 2, kind: input, shape index: {}]
  %s3 = inlined_call_operand.hbm [shape: f32[512,128], index: 3, kind: output, shape index: {}]
  %s4 = sld [smem:[#allocation0]]
  $region22: #{tpu_custom_call.1} parent=0
    _
  %s6 = ssub.s32 1, %s4
  %s7 = scalar_select 0, %s6, %s4
  $region1: #{tpu_custom_call.1} parent=0
    #allocation2 [shape = 'u8[262144]{0}', space=vmem, size = 0x40000, scoped, tag = 'output window, operand 0, single buffered']
    #allocation3 [shape = 's32[1]{0}', space=sflag, size = 0x4, scoped, tag = 'scoped memory for tpu_custom_call.1']
    %8 = vsyncpa [#allocation3], 0
    // Predicated region
    $region2: #{tpu_custom_call.1} parent=1 // pred_check
      _
    $region3: #{tpu_custom_call.1} parent=1 // pred_check_branch
      %10 = sbr.rel (0) target = $region5
    $region4: #{tpu_custom_call.1} parent=1 // pred_region
      _
    $region5: #{tpu_custom_call.1} parent=1 // pred_fallthru
      _
    // Predicated region
    $region6: #{tpu_custom_call.1} parent=1 // pred_check
      _
    $region7: #{tpu_custom_call.1} parent=1 // pred_check_branch
      %12 = sbr.rel (0) target = $region9
    $region8: #{tpu_custom_call.1} parent=1 // pred_region
      _
    $region9: #{tpu_custom_call.1} parent=1 // pred_fallthru
      _
    // Predicated region
    $region10: #{tpu_custom_call.1} parent=1 // pred_check
      _
    $region11: #{tpu_custom_call.1} parent=1 // pred_check_branch
      %14 = sbr.rel (0) target = $region13
    $region12: #{tpu_custom_call.1} parent=1 // pred_region
      _
    $region13: #{tpu_custom_call.1} parent=1 // pred_fallthru
      _
    %v16 = vld [vmem:[%s0] sm:$0xf]
    %v17 = vld [vmem:[%s0 + $0x4] sm:$0xf]
    %v18 = vld [vmem:[%s0 + $0x8] sm:$0xf]
    %v19 = vld [vmem:[%s0 + $0xc] sm:$0xf]
    %v20 = vld [vmem:[%s0 + $0x10] sm:$0xf]
    %v21 = vld [vmem:[%s0 + $0x14] sm:$0xf]
    %v22 = vld [vmem:[%s0 + $0x18] sm:$0xf]
    %v23 = vld [vmem:[%s0 + $0x1c] sm:$0xf]
    %v24 = vld [vmem:[%s0 + $0x20] sm:$0xf]
    %v25 = vld [vmem:[%s0 + $0x24] sm:$0xf]
    %v26 = vld [vmem:[%s0 + $0x28] sm:$0xf]
    %v27 = vld [vmem:[%s0 + $0x2c] sm:$0xf]
    %v28 = vld [vmem:[%s0 + $0x30] sm:$0xf]
    %v29 = vld [vmem:[%s0 + $0x34] sm:$0xf]
    %v30 = vld [vmem:[%s0 + $0x38] sm:$0xf]
    %v31 = vld [vmem:[%s0 + $0x3c] sm:$0xf]
    %v32 = vld [vmem:[%s0 + $0x40] sm:$0xf]
    %v33 = vld [vmem:[%s0 + $0x44] sm:$0xf]
    %v34 = vld [vmem:[%s0 + $0x48] sm:$0xf]
    %v35 = vld [vmem:[%s0 + $0x4c] sm:$0xf]
    %v36 = vld [vmem:[%s0 + $0x50] sm:$0xf]
    %v37 = vld [vmem:[%s0 + $0x54] sm:$0xf]
    %v38 = vld [vmem:[%s0 + $0x58] sm:$0xf]
    %v39 = vld [vmem:[%s0 + $0x5c] sm:$0xf]
    %v40 = vld [vmem:[%s0 + $0x60] sm:$0xf]
    %v41 = vld [vmem:[%s0 + $0x64] sm:$0xf]
    %v42 = vld [vmem:[%s0 + $0x68] sm:$0xf]
    %v43 = vld [vmem:[%s0 + $0x6c] sm:$0xf]
    %v44 = vld [vmem:[%s0 + $0x70] sm:$0xf]
    %v45 = vld [vmem:[%s0 + $0x74] sm:$0xf]
    %v46 = vld [vmem:[%s0 + $0x78] sm:$0xf]
    %v47 = vld [vmem:[%s0 + $0x7c] sm:$0xf]
    %v48 = vld [vmem:[%s0 + $0x80] sm:$0xf]
    %v49 = vld [vmem:[%s0 + $0x84] sm:$0xf]
    %v50 = vld [vmem:[%s0 + $0x88] sm:$0xf]
    %v51 = vld [vmem:[%s0 + $0x8c] sm:$0xf]
    %v52 = vld [vmem:[%s0 + $0x90] sm:$0xf]
    %v53 = vld [vmem:[%s0 + $0x94] sm:$0xf]
    %v54 = vld [vmem:[%s0 + $0x98] sm:$0xf]
    %v55 = vld [vmem:[%s0 + $0x9c] sm:$0xf]
    %v56 = vld [vmem:[%s0 + $0xa0] sm:$0xf]
    %v57 = vld [vmem:[%s0 + $0xa4] sm:$0xf]
    %v58 = vld [vmem:[%s0 + $0xa8] sm:$0xf]
    %v59 = vld [vmem:[%s0 + $0xac] sm:$0xf]
    %v60 = vld [vmem:[%s0 + $0xb0] sm:$0xf]
    %v61 = vld [vmem:[%s0 + $0xb4] sm:$0xf]
    %v62 = vld [vmem:[%s0 + $0xb8] sm:$0xf]
    %v63 = vld [vmem:[%s0 + $0xbc] sm:$0xf]
    %v64 = vld [vmem:[%s0 + $0xc0] sm:$0xf]
    %v65 = vld [vmem:[%s0 + $0xc4] sm:$0xf]
    %v66 = vld [vmem:[%s0 + $0xc8] sm:$0xf]
    %v67 = vld [vmem:[%s0 + $0xcc] sm:$0xf]
    %v68 = vld [vmem:[%s0 + $0xd0] sm:$0xf]
    %v69 = vld [vmem:[%s0 + $0xd4] sm:$0xf]
    %v70 = vld [vmem:[%s0 + $0xd8] sm:$0xf]
    %v71 = vld [vmem:[%s0 + $0xdc] sm:$0xf]
    %v72 = vld [vmem:[%s0 + $0xe0] sm:$0xf]
    %v73 = vld [vmem:[%s0 + $0xe4] sm:$0xf]
    %v74 = vld [vmem:[%s0 + $0xe8] sm:$0xf]
    %v75 = vld [vmem:[%s0 + $0xec] sm:$0xf]
    %v76 = vld [vmem:[%s0 + $0xf0] sm:$0xf]
    %v77 = vld [vmem:[%s0 + $0xf4] sm:$0xf]
    %v78 = vld [vmem:[%s0 + $0xf8] sm:$0xf]
    %v79 = vld [vmem:[%s0 + $0xfc] sm:$0xf]
    %v80 = vld [vmem:[%s1] sm:$0xf]
    %v81 = vld [vmem:[%s1 + $0x4] sm:$0xf]
    %v82 = vld [vmem:[%s1 + $0x8] sm:$0xf]
    %v83 = vld [vmem:[%s1 + $0xc] sm:$0xf]
    %v84 = vld [vmem:[%s1 + $0x10] sm:$0xf]
    %v85 = vld [vmem:[%s1 + $0x14] sm:$0xf]
    %v86 = vld [vmem:[%s1 + $0x18] sm:$0xf]
    %v87 = vld [vmem:[%s1 + $0x1c] sm:$0xf]
    %v88 = vld [vmem:[%s2] sm:$0x1]
    %v90 = vperm.slane %v88, 0
    %v156 = vunpack.c.l.b16 %v16
    %v157 = vunpack.c.l.b16 %v17
    %v158 = vunpack.c.l.b16 %v18
    %v159 = vunpack.c.l.b16 %v19
    %v160 = vunpack.c.l.b16 %v20
    %v161 = vunpack.c.l.b16 %v21
    %v162 = vunpack.c.l.b16 %v22
    %v163 = vunpack.c.l.b16 %v23
    %v164 = vunpack.c.l.b16 %v24
    %v165 = vunpack.c.l.b16 %v25
    %v166 = vunpack.c.l.b16 %v26
    %v167 = vunpack.c.l.b16 %v27
    %v168 = vunpack.c.l.b16 %v28
    %v169 = vunpack.c.l.b16 %v29
    %v170 = vunpack.c.l.b16 %v30
    %v171 = vunpack.c.l.b16 %v31
    %v172 = vunpack.c.l.b16 %v32
    %v173 = vunpack.c.l.b16 %v33
    %v174 = vunpack.c.l.b16 %v34
    %v175 = vunpack.c.l.b16 %v35
    %v176 = vunpack.c.l.b16 %v36
    %v177 = vunpack.c.l.b16 %v37
    %v178 = vunpack.c.l.b16 %v38
    %v179 = vunpack.c.l.b16 %v39
    %v180 = vunpack.c.l.b16 %v40
    %v181 = vunpack.c.l.b16 %v41
    %v182 = vunpack.c.l.b16 %v42
    %v183 = vunpack.c.l.b16 %v43
    %v184 = vunpack.c.l.b16 %v44
    %v185 = vunpack.c.l.b16 %v45
    %v186 = vunpack.c.l.b16 %v46
    %v187 = vunpack.c.l.b16 %v47
    %v188 = vunpack.c.l.b16 %v48
    %v189 = vunpack.c.l.b16 %v49
    %v190 = vunpack.c.l.b16 %v50
    %v191 = vunpack.c.l.b16 %v51
    %v192 = vunpack.c.l.b16 %v52
    %v193 = vunpack.c.l.b16 %v53
    %v194 = vunpack.c.l.b16 %v54
    %v195 = vunpack.c.l.b16 %v55
    %v196 = vunpack.c.l.b16 %v56
    %v197 = vunpack.c.l.b16 %v57
    %v198 = vunpack.c.l.b16 %v58
    %v199 = vunpack.c.l.b16 %v59
    %v200 = vunpack.c.l.b16 %v60
    %v201 = vunpack.c.l.b16 %v61
    %v202 = vunpack.c.l.b16 %v62
    %v203 = vunpack.c.l.b16 %v63
    %v204 = vunpack.c.l.b16 %v64
    %v205 = vunpack.c.l.b16 %v65
    %v206 = vunpack.c.l.b16 %v66
    %v207 = vunpack.c.l.b16 %v67
    %v208 = vunpack.c.l.b16 %v68
    %v209 = vunpack.c.l.b16 %v69
    %v210 = vunpack.c.l.b16 %v70
    %v211 = vunpack.c.l.b16 %v71
    %v212 = vunpack.c.l.b16 %v72
    %v213 = vunpack.c.l.b16 %v73
    %v214 = vunpack.c.l.b16 %v74
    %v215 = vunpack.c.l.b16 %v75
    %v216 = vunpack.c.l.b16 %v76
    %v217 = vunpack.c.l.b16 %v77
    %v218 = vunpack.c.l.b16 %v78
    %v219 = vunpack.c.l.b16 %v79
    %v220 = vpack.c.b16 %v157, %v156
    %v221 = vpack.c.b16 %v159, %v158
    %v222 = vpack.c.b16 %v161, %v160
    %v223 = vpack.c.b16 %v163, %v162
    %v224 = vpack.c.b16 %v165, %v164
    %v225 = vpack.c.b16 %v167, %v166
    %v226 = vpack.c.b16 %v169, %v168
    %v227 = vpack.c.b16 %v171, %v170
    %v228 = vpack.c.b16 %v173, %v172
    %v229 = vpack.c.b16 %v175, %v174
    %v230 = vpack.c.b16 %v177, %v176
    %v231 = vpack.c.b16 %v179, %v178
    %v232 = vpack.c.b16 %v181, %v180
    %v233 = vpack.c.b16 %v183, %v182
    %v234 = vpack.c.b16 %v185, %v184
    %v235 = vpack.c.b16 %v187, %v186
    %v236 = vpack.c.b16 %v189, %v188
    %v237 = vpack.c.b16 %v191, %v190
    %v238 = vpack.c.b16 %v193, %v192
    %v239 = vpack.c.b16 %v195, %v194
    %v240 = vpack.c.b16 %v197, %v196
    %v241 = vpack.c.b16 %v199, %v198
    %v242 = vpack.c.b16 %v201, %v200
    %v243 = vpack.c.b16 %v203, %v202
    %v244 = vpack.c.b16 %v205, %v204
    %v245 = vpack.c.b16 %v207, %v206
    %v246 = vpack.c.b16 %v209, %v208
    %v247 = vpack.c.b16 %v211, %v210
    %v248 = vpack.c.b16 %v213, %v212
    %v249 = vpack.c.b16 %v215, %v214
    %v250 = vpack.c.b16 %v217, %v216
    %v251 = vpack.c.b16 %v219, %v218
    %v260 = vunpack.c.l.b16 %v80
    %v261 = vunpack.c.l.b16 %v81
    %v262 = vunpack.c.l.b16 %v82
    %v263 = vunpack.c.l.b16 %v83
    %v264 = vunpack.c.l.b16 %v84
    %v265 = vunpack.c.l.b16 %v85
    %v266 = vunpack.c.l.b16 %v86
    %v267 = vunpack.c.l.b16 %v87
    %v268 = vpack.c.b16 %v261, %v260
    %v269 = vpack.c.b16 %v263, %v262
    %v270 = vpack.c.b16 %v265, %v264
    %v271 = vpack.c.b16 %v267, %v266
    %vm276 = vcmask 523264
    %v278 = vsel %vm276, %v220, 0
    %v281 = vsel %vm276, %v221, 0
    %v284 = vsel %vm276, %v222, 0
    %v287 = vsel %vm276, %v223, 0
    %v290 = vsel %vm276, %v224, 0
    %v293 = vsel %vm276, %v225, 0
    %v296 = vsel %vm276, %v226, 0
    %v299 = vsel %vm276, %v227, 0
    %v302 = vsel %vm276, %v228, 0
    %v305 = vsel %vm276, %v229, 0
    %v308 = vsel %vm276, %v230, 0
    %v311 = vsel %vm276, %v231, 0
    %v314 = vsel %vm276, %v232, 0
    %v317 = vsel %vm276, %v233, 0
    %v320 = vsel %vm276, %v234, 0
    %v323 = vsel %vm276, %v235, 0
    %v326 = vsel %vm276, %v236, 0
    %v329 = vsel %vm276, %v237, 0
    %v332 = vsel %vm276, %v238, 0
    %v335 = vsel %vm276, %v239, 0
    %v338 = vsel %vm276, %v240, 0
    %v341 = vsel %vm276, %v241, 0
    %v344 = vsel %vm276, %v242, 0
    %v347 = vsel %vm276, %v243, 0
    %v350 = vsel %vm276, %v244, 0
    %v353 = vsel %vm276, %v245, 0
    %v356 = vsel %vm276, %v246, 0
    %v359 = vsel %vm276, %v247, 0
    %v362 = vsel %vm276, %v248, 0
    %v365 = vsel %vm276, %v249, 0
    %v368 = vsel %vm276, %v250, 0
    %v371 = vsel %vm276, %v251, 0
    %373 = vmatpush.bf16.msra.mxu0 0
    %374 = vmatpush.bf16.msra.mxu0 0
    %375 = vmatpush.bf16.msra.mxu0 0
    %376 = vmatpush.bf16.msra.mxu0 0
    %377 = vmatpush.bf16.msra.mxu0 %v271
    %378 = vmatpush.bf16.msra.mxu0 %v270
    %379 = vmatpush.bf16.msra.mxu0 %v269
    %380 = vmatpush.bf16.msra.mxu0 %v268
    %381 = vmatmul.bf16.gmra.mxu0 %v278
    %v382 = vpop.f32.mrf.mxu0
    %v383 = vadd.f32 %v90, %v382
    %v384 = vpop.f32.mrf.mxu0
    %v385 = vadd.f32 %v90, %v384
    %386 = vmatmul.bf16.gmra.mxu0 %v281
    %v387 = vpop.f32.mrf.mxu0
    %v388 = vadd.f32 %v90, %v387
    %v389 = vpop.f32.mrf.mxu0
    %v390 = vadd.f32 %v90, %v389
    %391 = vmatmul.bf16.gmra.mxu0 %v284
    %v392 = vpop.f32.mrf.mxu0
    %v393 = vadd.f32 %v90, %v392
    %v394 = vpop.f32.mrf.mxu0
    %v395 = vadd.f32 %v90, %v394
    %396 = vmatmul.bf16.gmra.mxu0 %v287
    %v397 = vpop.f32.mrf.mxu0
    %v398 = vadd.f32 %v90, %v397
    %v399 = vpop.f32.mrf.mxu0
    %v400 = vadd.f32 %v90, %v399
    %401 = vmatmul.bf16.gmra.mxu0 %v290
    %v402 = vpop.f32.mrf.mxu0
    %v403 = vadd.f32 %v90, %v402
    %v404 = vpop.f32.mrf.mxu0
    %v405 = vadd.f32 %v90, %v404
    %406 = vmatmul.bf16.gmra.mxu0 %v293
    %v407 = vpop.f32.mrf.mxu0
    %v408 = vadd.f32 %v90, %v407
    %v409 = vpop.f32.mrf.mxu0
    %v410 = vadd.f32 %v90, %v409
    %411 = vmatmul.bf16.gmra.mxu0 %v296
    %v412 = vpop.f32.mrf.mxu0
    %v413 = vadd.f32 %v90, %v412
    %v414 = vpop.f32.mrf.mxu0
    %v415 = vadd.f32 %v90, %v414
    %416 = vmatmul.bf16.gmra.mxu0 %v299
    %v417 = vpop.f32.mrf.mxu0
    %v418 = vadd.f32 %v90, %v417
    %v419 = vpop.f32.mrf.mxu0
    %v420 = vadd.f32 %v90, %v419
    %421 = vmatmul.bf16.gmra.mxu0 %v302
    %v422 = vpop.f32.mrf.mxu0
    %v423 = vadd.f32 %v90, %v422
    %v424 = vpop.f32.mrf.mxu0
    %v425 = vadd.f32 %v90, %v424
    %426 = vmatmul.bf16.gmra.mxu0 %v305
    %v427 = vpop.f32.mrf.mxu0
    %v428 = vadd.f32 %v90, %v427
    %v429 = vpop.f32.mrf.mxu0
    %v430 = vadd.f32 %v90, %v429
    %431 = vmatmul.bf16.gmra.mxu0 %v308
    %v432 = vpop.f32.mrf.mxu0
    %v433 = vadd.f32 %v90, %v432
    %v434 = vpop.f32.mrf.mxu0
    %v435 = vadd.f32 %v90, %v434
    %436 = vmatmul.bf16.gmra.mxu0 %v311
    %v437 = vpop.f32.mrf.mxu0
    %v438 = vadd.f32 %v90, %v437
    %v439 = vpop.f32.mrf.mxu0
    %v440 = vadd.f32 %v90, %v439
    %441 = vmatmul.bf16.gmra.mxu0 %v314
    %v442 = vpop.f32.mrf.mxu0
    %v443 = vadd.f32 %v90, %v442
    %v444 = vpop.f32.mrf.mxu0
    %v445 = vadd.f32 %v90, %v444
    %446 = vmatmul.bf16.gmra.mxu0 %v317
    %v447 = vpop.f32.mrf.mxu0
    %v448 = vadd.f32 %v90, %v447
    %v449 = vpop.f32.mrf.mxu0
    %v450 = vadd.f32 %v90, %v449
    %451 = vmatmul.bf16.gmra.mxu0 %v320
    %v452 = vpop.f32.mrf.mxu0
    %v453 = vadd.f32 %v90, %v452
    %v454 = vpop.f32.mrf.mxu0
    %v455 = vadd.f32 %v90, %v454
    %456 = vmatmul.bf16.gmra.mxu0 %v323
    %v457 = vpop.f32.mrf.mxu0
    %v458 = vadd.f32 %v90, %v457
    %v459 = vpop.f32.mrf.mxu0
    %v460 = vadd.f32 %v90, %v459
    %461 = vmatmul.bf16.gmra.mxu0 %v326
    %v462 = vpop.f32.mrf.mxu0
    %v463 = vadd.f32 %v90, %v462
    %v464 = vpop.f32.mrf.mxu0
    %v465 = vadd.f32 %v90, %v464
    %466 = vmatmul.bf16.gmra.mxu0 %v329
    %v467 = vpop.f32.mrf.mxu0
    %v468 = vadd.f32 %v90, %v467
    %v469 = vpop.f32.mrf.mxu0
    %v470 = vadd.f32 %v90, %v469
    %471 = vmatmul.bf16.gmra.mxu0 %v332
    %v472 = vpop.f32.mrf.mxu0
    %v473 = vadd.f32 %v90, %v472
    %v474 = vpop.f32.mrf.mxu0
    %v475 = vadd.f32 %v90, %v474
    %476 = vmatmul.bf16.gmra.mxu0 %v335
    %v477 = vpop.f32.mrf.mxu0
    %v478 = vadd.f32 %v90, %v477
    %v479 = vpop.f32.mrf.mxu0
    %v480 = vadd.f32 %v90, %v479
    %481 = vmatmul.bf16.gmra.mxu0 %v338
    %v482 = vpop.f32.mrf.mxu0
    %v483 = vadd.f32 %v90, %v482
    %v484 = vpop.f32.mrf.mxu0
    %v485 = vadd.f32 %v90, %v484
    %486 = vmatmul.bf16.gmra.mxu0 %v341
    %v487 = vpop.f32.mrf.mxu0
    %v488 = vadd.f32 %v90, %v487
    %v489 = vpop.f32.mrf.mxu0
    %v490 = vadd.f32 %v90, %v489
    %491 = vmatmul.bf16.gmra.mxu0 %v344
    %v492 = vpop.f32.mrf.mxu0
    %v493 = vadd.f32 %v90, %v492
    %v494 = vpop.f32.mrf.mxu0
    %v495 = vadd.f32 %v90, %v494
    %496 = vmatmul.bf16.gmra.mxu0 %v347
    %v497 = vpop.f32.mrf.mxu0
    %v498 = vadd.f32 %v90, %v497
    %v499 = vpop.f32.mrf.mxu0
    %v500 = vadd.f32 %v90, %v499
    %501 = vmatmul.bf16.gmra.mxu0 %v350
    %v502 = vpop.f32.mrf.mxu0
    %v503 = vadd.f32 %v90, %v502
    %v504 = vpop.f32.mrf.mxu0
    %v505 = vadd.f32 %v90, %v504
    %506 = vmatmul.bf16.gmra.mxu0 %v353
    %v507 = vpop.f32.mrf.mxu0
    %v508 = vadd.f32 %v90, %v507
    %v509 = vpop.f32.mrf.mxu0
    %v510 = vadd.f32 %v90, %v509
    %511 = vmatmul.bf16.gmra.mxu0 %v356
    %v512 = vpop.f32.mrf.mxu0
    %v513 = vadd.f32 %v90, %v512
    %v514 = vpop.f32.mrf.mxu0
    %v515 = vadd.f32 %v90, %v514
    %516 = vmatmul.bf16.gmra.mxu0 %v359
    %v517 = vpop.f32.mrf.mxu0
    %v518 = vadd.f32 %v90, %v517
    %v519 = vpop.f32.mrf.mxu0
    %v520 = vadd.f32 %v90, %v519
    %521 = vmatmul.bf16.gmra.mxu0 %v362
    %v522 = vpop.f32.mrf.mxu0
    %v523 = vadd.f32 %v90, %v522
    %v524 = vpop.f32.mrf.mxu0
    %v525 = vadd.f32 %v90, %v524
    %526 = vmatmul.bf16.gmra.mxu0 %v365
    %v527 = vpop.f32.mrf.mxu0
    %v528 = vadd.f32 %v90, %v527
    %v529 = vpop.f32.mrf.mxu0
    %v530 = vadd.f32 %v90, %v529
    %531 = vmatmul.bf16.gmra.mxu0 %v368
    %v532 = vpop.f32.mrf.mxu0
    %v533 = vadd.f32 %v90, %v532
    %v534 = vpop.f32.mrf.mxu0
    %v535 = vadd.f32 %v90, %v534
    %536 = vmatmul.bf16.gmra.mxu0 %v371
    %v537 = vpop.f32.mrf.mxu0
    %v538 = vadd.f32 %v90, %v537
    %v539 = vpop.f32.mrf.mxu0
    %v540 = vadd.f32 %v90, %v539
    %541 = vdwg.mxu0
    %vm542 = vcmp.ge.f32.partialorder %v383, 0.0
    %vm543 = vcmp.ge.f32.partialorder %v385, 0.0
    %vm544 = vcmp.ge.f32.partialorder %v388, 0.0
    %vm545 = vcmp.ge.f32.partialorder %v390, 0.0
    %vm546 = vcmp.ge.f32.partialorder %v393, 0.0
    %vm547 = vcmp.ge.f32.partialorder %v395, 0.0
    %vm548 = vcmp.ge.f32.partialorder %v398, 0.0
    %vm549 = vcmp.ge.f32.partialorder %v400, 0.0
    %vm550 = vcmp.ge.f32.partialorder %v403, 0.0
    %vm551 = vcmp.ge.f32.partialorder %v405, 0.0
    %vm552 = vcmp.ge.f32.partialorder %v408, 0.0
    %vm553 = vcmp.ge.f32.partialorder %v410, 0.0
    %vm554 = vcmp.ge.f32.partialorder %v413, 0.0
    %vm555 = vcmp.ge.f32.partialorder %v415, 0.0
    %vm556 = vcmp.ge.f32.partialorder %v418, 0.0
    %vm557 = vcmp.ge.f32.partialorder %v420, 0.0
    %vm558 = vcmp.ge.f32.partialorder %v423, 0.0
    %vm559 = vcmp.ge.f32.partialorder %v425, 0.0
    %vm560 = vcmp.ge.f32.partialorder %v428, 0.0
    %vm561 = vcmp.ge.f32.partialorder %v430, 0.0
    %vm562 = vcmp.ge.f32.partialorder %v433, 0.0
    %vm563 = vcmp.ge.f32.partialorder %v435, 0.0
    %vm564 = vcmp.ge.f32.partialorder %v438, 0.0
    %vm565 = vcmp.ge.f32.partialorder %v440, 0.0
    %vm566 = vcmp.ge.f32.partialorder %v443, 0.0
    %vm567 = vcmp.ge.f32.partialorder %v445, 0.0
    %vm568 = vcmp.ge.f32.partialorder %v448, 0.0
    %vm569 = vcmp.ge.f32.partialorder %v450, 0.0
    %vm570 = vcmp.ge.f32.partialorder %v453, 0.0
    %vm571 = vcmp.ge.f32.partialorder %v455, 0.0
    %vm572 = vcmp.ge.f32.partialorder %v458, 0.0
    %vm573 = vcmp.ge.f32.partialorder %v460, 0.0
    %vm574 = vcmp.ge.f32.partialorder %v463, 0.0
    %vm575 = vcmp.ge.f32.partialorder %v465, 0.0
    %vm576 = vcmp.ge.f32.partialorder %v468, 0.0
    %vm577 = vcmp.ge.f32.partialorder %v470, 0.0
    %vm578 = vcmp.ge.f32.partialorder %v473, 0.0
    %vm579 = vcmp.ge.f32.partialorder %v475, 0.0
    %vm580 = vcmp.ge.f32.partialorder %v478, 0.0
    %vm581 = vcmp.ge.f32.partialorder %v480, 0.0
    %vm582 = vcmp.ge.f32.partialorder %v483, 0.0
    %vm583 = vcmp.ge.f32.partialorder %v485, 0.0
    %vm584 = vcmp.ge.f32.partialorder %v488, 0.0
    %vm585 = vcmp.ge.f32.partialorder %v490, 0.0
    %vm586 = vcmp.ge.f32.partialorder %v493, 0.0
    %vm587 = vcmp.ge.f32.partialorder %v495, 0.0
    %vm588 = vcmp.ge.f32.partialorder %v498, 0.0
    %vm589 = vcmp.ge.f32.partialorder %v500, 0.0
    %vm590 = vcmp.ge.f32.partialorder %v503, 0.0
    %vm591 = vcmp.ge.f32.partialorder %v505, 0.0
    %vm592 = vcmp.ge.f32.partialorder %v508, 0.0
    %vm593 = vcmp.ge.f32.partialorder %v510, 0.0
    %vm594 = vcmp.ge.f32.partialorder %v513, 0.0
    %vm595 = vcmp.ge.f32.partialorder %v515, 0.0
    %vm596 = vcmp.ge.f32.partialorder %v518, 0.0
    %vm597 = vcmp.ge.f32.partialorder %v520, 0.0
    %vm598 = vcmp.ge.f32.partialorder %v523, 0.0
    %vm599 = vcmp.ge.f32.partialorder %v525, 0.0
    %vm600 = vcmp.ge.f32.partialorder %v528, 0.0
    %vm601 = vcmp.ge.f32.partialorder %v530, 0.0
    %vm602 = vcmp.ge.f32.partialorder %v533, 0.0
    %vm603 = vcmp.ge.f32.partialorder %v535, 0.0
    %vm604 = vcmp.ge.f32.partialorder %v538, 0.0
    %vm605 = vcmp.ge.f32.partialorder %v540, 0.0
    %v606 = vmul.f32 %v383, 0.2
    %v607 = vmul.f32 %v385, 0.2
    %v608 = vmul.f32 %v388, 0.2
    %v609 = vmul.f32 %v390, 0.2
    %v610 = vmul.f32 %v393, 0.2
    %v611 = vmul.f32 %v395, 0.2
    %v612 = vmul.f32 %v398, 0.2
    %v613 = vmul.f32 %v400, 0.2
    %v614 = vmul.f32 %v403, 0.2
    %v615 = vmul.f32 %v405, 0.2
    %v616 = vmul.f32 %v408, 0.2
    %v617 = vmul.f32 %v410, 0.2
    %v618 = vmul.f32 %v413, 0.2
    %v619 = vmul.f32 %v415, 0.2
    %v620 = vmul.f32 %v418, 0.2
    %v621 = vmul.f32 %v420, 0.2
    %v622 = vmul.f32 %v423, 0.2
    %v623 = vmul.f32 %v425, 0.2
    %v624 = vmul.f32 %v428, 0.2
    %v625 = vmul.f32 %v430, 0.2
    %v626 = vmul.f32 %v433, 0.2
    %v627 = vmul.f32 %v435, 0.2
    %v628 = vmul.f32 %v438, 0.2
    %v629 = vmul.f32 %v440, 0.2
    %v630 = vmul.f32 %v443, 0.2
    %v631 = vmul.f32 %v445, 0.2
    %v632 = vmul.f32 %v448, 0.2
    %v633 = vmul.f32 %v450, 0.2
    %v634 = vmul.f32 %v453, 0.2
    %v635 = vmul.f32 %v455, 0.2
    %v636 = vmul.f32 %v458, 0.2
    %v637 = vmul.f32 %v460, 0.2
    %v638 = vmul.f32 %v463, 0.2
    %v639 = vmul.f32 %v465, 0.2
    %v640 = vmul.f32 %v468, 0.2
    %v641 = vmul.f32 %v470, 0.2
    %v642 = vmul.f32 %v473, 0.2
    %v643 = vmul.f32 %v475, 0.2
    %v644 = vmul.f32 %v478, 0.2
    %v645 = vmul.f32 %v480, 0.2
    %v646 = vmul.f32 %v483, 0.2
    %v647 = vmul.f32 %v485, 0.2
    %v648 = vmul.f32 %v488, 0.2
    %v649 = vmul.f32 %v490, 0.2
    %v650 = vmul.f32 %v493, 0.2
    %v651 = vmul.f32 %v495, 0.2
    %v652 = vmul.f32 %v498, 0.2
    %v653 = vmul.f32 %v500, 0.2
    %v654 = vmul.f32 %v503, 0.2
    %v655 = vmul.f32 %v505, 0.2
    %v656 = vmul.f32 %v508, 0.2
    %v657 = vmul.f32 %v510, 0.2
    %v658 = vmul.f32 %v513, 0.2
    %v659 = vmul.f32 %v515, 0.2
    %v660 = vmul.f32 %v518, 0.2
    %v661 = vmul.f32 %v520, 0.2
    %v662 = vmul.f32 %v523, 0.2
    %v663 = vmul.f32 %v525, 0.2
    %v664 = vmul.f32 %v528, 0.2
    %v665 = vmul.f32 %v530, 0.2
    %v666 = vmul.f32 %v533, 0.2
    %v667 = vmul.f32 %v535, 0.2
    %v668 = vmul.f32 %v538, 0.2
    %v669 = vmul.f32 %v540, 0.2
    %v670 = vsel %vm542, %v383, %v606
    %v671 = vsel %vm543, %v385, %v607
    %v672 = vsel %vm544, %v388, %v608
    %v673 = vsel %vm545, %v390, %v609
    %v674 = vsel %vm546, %v393, %v610
    %v675 = vsel %vm547, %v395, %v611
    %v676 = vsel %vm548, %v398, %v612
    %v677 = vsel %vm549, %v400, %v613
    %v678 = vsel %vm550, %v403, %v614
    %v679 = vsel %vm551, %v405, %v615
    %v680 = vsel %vm552, %v408, %v616
    %v681 = vsel %vm553, %v410, %v617
    %v682 = vsel %vm554, %v413, %v618
    %v683 = vsel %vm555, %v415, %v619
    %v684 = vsel %vm556, %v418, %v620
    %v685 = vsel %vm557, %v420, %v621
    %v686 = vsel %vm558, %v423, %v622
    %v687 = vsel %vm559, %v425, %v623
    %v688 = vsel %vm560, %v428, %v624
    %v689 = vsel %vm561, %v430, %v625
    %v690 = vsel %vm562, %v433, %v626
    %v691 = vsel %vm563, %v435, %v627
    %v692 = vsel %vm564, %v438, %v628
    %v693 = vsel %vm565, %v440, %v629
    %v694 = vsel %vm566, %v443, %v630
    %v695 = vsel %vm567, %v445, %v631
    %v696 = vsel %vm568, %v448, %v632
    %v697 = vsel %vm569, %v450, %v633
    %v698 = vsel %vm570, %v453, %v634
    %v699 = vsel %vm571, %v455, %v635
    %v700 = vsel %vm572, %v458, %v636
    %v701 = vsel %vm573, %v460, %v637
    %v702 = vsel %vm574, %v463, %v638
    %v703 = vsel %vm575, %v465, %v639
    %v704 = vsel %vm576, %v468, %v640
    %v705 = vsel %vm577, %v470, %v641
    %v706 = vsel %vm578, %v473, %v642
    %v707 = vsel %vm579, %v475, %v643
    %v708 = vsel %vm580, %v478, %v644
    %v709 = vsel %vm581, %v480, %v645
    %v710 = vsel %vm582, %v483, %v646
    %v711 = vsel %vm583, %v485, %v647
    %v712 = vsel %vm584, %v488, %v648
    %v713 = vsel %vm585, %v490, %v649
    %v714 = vsel %vm586, %v493, %v650
    %v715 = vsel %vm587, %v495, %v651
    %v716 = vsel %vm588, %v498, %v652
    %v717 = vsel %vm589, %v500, %v653
    %v718 = vsel %vm590, %v503, %v654
    %v719 = vsel %vm591, %v505, %v655
    %v720 = vsel %vm592, %v508, %v656
    %v721 = vsel %vm593, %v510, %v657
    %v722 = vsel %vm594, %v513, %v658
    %v723 = vsel %vm595, %v515, %v659
    %v724 = vsel %vm596, %v518, %v660
    %v725 = vsel %vm597, %v520, %v661
    %v726 = vsel %vm598, %v523, %v662
    %v727 = vsel %vm599, %v525, %v663
    %v728 = vsel %vm600, %v528, %v664
    %v729 = vsel %vm601, %v530, %v665
    %v730 = vsel %vm602, %v533, %v666
    %v731 = vsel %vm603, %v535, %v667
    %v732 = vsel %vm604, %v538, %v668
    %v733 = vsel %vm605, %v540, %v669
    %734 = vst [vmem:[#allocation2] sm:$0xff] %v670
    %735 = vst [vmem:[#allocation2 + $0x8] sm:$0xff] %v671
    %736 = vst [vmem:[#allocation2 + $0x10] sm:$0xff] %v672
    %737 = vst [vmem:[#allocation2 + $0x18] sm:$0xff] %v673
    %738 = vst [vmem:[#allocation2 + $0x20] sm:$0xff] %v674
    %739 = vst [vmem:[#allocation2 + $0x28] sm:$0xff] %v675
    %740 = vst [vmem:[#allocation2 + $0x30] sm:$0xff] %v676
    %741 = vst [vmem:[#allocation2 + $0x38] sm:$0xff] %v677
    %742 = vst [vmem:[#allocation2 + $0x40] sm:$0xff] %v678
    %743 = vst [vmem:[#allocation2 + $0x48] sm:$0xff] %v679
    %744 = vst [vmem:[#allocation2 + $0x50] sm:$0xff] %v680
    %745 = vst [vmem:[#allocation2 + $0x58] sm:$0xff] %v681
    %746 = vst [vmem:[#allocation2 + $0x60] sm:$0xff] %v682
    %747 = vst [vmem:[#allocation2 + $0x68] sm:$0xff] %v683
    %748 = vst [vmem:[#allocation2 + $0x70] sm:$0xff] %v684
    %749 = vst [vmem:[#allocation2 + $0x78] sm:$0xff] %v685
    %750 = vst [vmem:[#allocation2 + $0x80] sm:$0xff] %v686
    %751 = vst [vmem:[#allocation2 + $0x88] sm:$0xff] %v687
    %752 = vst [vmem:[#allocation2 + $0x90] sm:$0xff] %v688
    %753 = vst [vmem:[#allocation2 + $0x98] sm:$0xff] %v689
    %754 = vst [vmem:[#allocation2 + $0xa0] sm:$0xff] %v690
    %755 = vst [vmem:[#allocation2 + $0xa8] sm:$0xff] %v691
    %756 = vst [vmem:[#allocation2 + $0xb0] sm:$0xff] %v692
    %757 = vst [vmem:[#allocation2 + $0xb8] sm:$0xff] %v693
    %758 = vst [vmem:[#allocation2 + $0xc0] sm:$0xff] %v694
    %759 = vst [vmem:[#allocation2 + $0xc8] sm:$0xff] %v695
    %760 = vst [vmem:[#allocation2 + $0xd0] sm:$0xff] %v696
    %761 = vst [vmem:[#allocation2 + $0xd8] sm:$0xff] %v697
    %762 = vst [vmem:[#allocation2 + $0xe0] sm:$0xff] %v698
    %763 = vst [vmem:[#allocation2 + $0xe8] sm:$0xff] %v699
    %764 = vst [vmem:[#allocation2 + $0xf0] sm:$0xff] %v700
    %765 = vst [vmem:[#allocation2 + $0xf8] sm:$0xff] %v701
    %766 = vst [vmem:[#allocation2 + $0x100] sm:$0xff] %v702
    %767 = vst [vmem:[#allocation2 + $0x108] sm:$0xff] %v703
    %768 = vst [vmem:[#allocation2 + $0x110] sm:$0xff] %v704
    %769 = vst [vmem:[#allocation2 + $0x118] sm:$0xff] %v705
    %770 = vst [vmem:[#allocation2 + $0x120] sm:$0xff] %v706
    %771 = vst [vmem:[#allocation2 + $0x128] sm:$0xff] %v707
    %772 = vst [vmem:[#allocation2 + $0x130] sm:$0xff] %v708
    %773 = vst [vmem:[#allocation2 + $0x138] sm:$0xff] %v709
    %774 = vst [vmem:[#allocation2 + $0x140] sm:$0xff] %v710
    %775 = vst [vmem:[#allocation2 + $0x148] sm:$0xff] %v711
    %776 = vst [vmem:[#allocation2 + $0x150] sm:$0xff] %v712
    %777 = vst [vmem:[#allocation2 + $0x158] sm:$0xff] %v713
    %778 = vst [vmem:[#allocation2 + $0x160] sm:$0xff] %v714
    %779 = vst [vmem:[#allocation2 + $0x168] sm:$0xff] %v715
    %780 = vst [vmem:[#allocation2 + $0x170] sm:$0xff] %v716
    %781 = vst [vmem:[#allocation2 + $0x178] sm:$0xff] %v717
    %782 = vst [vmem:[#allocation2 + $0x180] sm:$0xff] %v718
    %783 = vst [vmem:[#allocation2 + $0x188] sm:$0xff] %v719
    %784 = vst [vmem:[#allocation2 + $0x190] sm:$0xff] %v720
    %785 = vst [vmem:[#allocation2 + $0x198] sm:$0xff] %v721
    %786 = vst [vmem:[#allocation2 + $0x1a0] sm:$0xff] %v722
    %787 = vst [vmem:[#allocation2 + $0x1a8] sm:$0xff] %v723
    %788 = vst [vmem:[#allocation2 + $0x1b0] sm:$0xff] %v724
    %789 = vst [vmem:[#allocation2 + $0x1b8] sm:$0xff] %v725
    %790 = vst [vmem:[#allocation2 + $0x1c0] sm:$0xff] %v726
    %791 = vst [vmem:[#allocation2 + $0x1c8] sm:$0xff] %v727
    %792 = vst [vmem:[#allocation2 + $0x1d0] sm:$0xff] %v728
    %793 = vst [vmem:[#allocation2 + $0x1d8] sm:$0xff] %v729
    %794 = vst [vmem:[#allocation2 + $0x1e0] sm:$0xff] %v730
    %795 = vst [vmem:[#allocation2 + $0x1e8] sm:$0xff] %v731
    %796 = vst [vmem:[#allocation2 + $0x1f0] sm:$0xff] %v732
    %797 = vst [vmem:[#allocation2 + $0x1f8] sm:$0xff] %v733
    // Predicated region
    $region14: #{tpu_custom_call.1} parent=1 // pred_check
      _
    $region15: #{tpu_custom_call.1} parent=1 // pred_check_branch
      %799 = sbr.rel (0) target = $region17
    $region16: #{tpu_custom_call.1} parent=1 // pred_region
      %801 = vsyncadd [#allocation3], 0
      %s802 = sshll.u32 [#allocation2], 4
      %s803 = int_to_ptr.vmem [resolvable:$true] %s802
      %s804 = sshll.u32 %s3, 4
      %s805 = int_to_ptr.hbm [resolvable:$true] %s804
      %810 = dma.vmem_to_hbm [thread:$0]  %s803, 8192, %s805, [#allocation3], 128, 128, 8
    $region17: #{tpu_custom_call.1} parent=1 // pred_fallthru
      _
    // Predicated region
    $region18: #{tpu_custom_call.1} parent=1 // pred_check
      _
    $region19: #{tpu_custom_call.1} parent=1 // pred_check_branch
      %812 = sbr.rel (0) target = $region21
    $region20: #{tpu_custom_call.1} parent=1 // pred_region
      %814 = dma.done [#allocation3], 8192
    $region21: #{tpu_custom_call.1} parent=1 // pred_fallthru
      _
    %815 = vsyncpa [#allocation3], 1

</llo_original>
